<compile_context>
chip_gen: v5e
topology: v5e:2x2
jax: 0.10.0
libtpu: 0.0.40
codegen_flags: <defaults>
</compile_context>

<pallas_src>
import jax
import jax.numpy as jnp
from jax.experimental import pallas as pl
from jax.experimental.pallas import tpu as pltpu

BN_EPS = 1e-5


def _round_up(a, b):
    return (a + b - 1) // b * b


# --------------------------------------------------------------- small-N fused kernel
def _make_fused_kernel(n_actual):
    inv_n = 1.0 / float(n_actual)

    def kernel(x_ref, wt_ref, g_ref, be_ref, o_ref):
        z = jnp.dot(x_ref[...], wt_ref[...], preferred_element_type=jnp.float32)
        mean = jnp.sum(z, axis=0, keepdims=True) * inv_n
        zc = z - mean                       # z is VMEM-resident -> two-pass variance
        var = jnp.sum(zc * zc, axis=0, keepdims=True) * inv_n
        scale = g_ref[...] * jax.lax.rsqrt(var + BN_EPS)
        o_ref[...] = jnp.maximum(zc * scale + be_ref[...], 0.0).astype(o_ref.dtype)

    return kernel


# ----------------------------------------------------------- tiled pass A: statistics
def _make_stats_kernel(n_actual, tile_n, ragged):
    inv_n = 1.0 / float(n_actual)

    def kernel(x_ref, wt_ref, g_ref, be_ref, coef_ref):
        i = pl.program_id(0)

        @pl.when(i == 0)
        def _init():
            coef_ref[...] = jnp.zeros_like(coef_ref)

        # Linear without bias (bias cancels exactly under batch-stat BN).
        z = jnp.dot(x_ref[...], wt_ref[...], preferred_element_type=jnp.float32)

        if ragged:
            # Only the last tile overhangs N; OOB rows hold garbage -> mask for stats.
            row = i * tile_n + jax.lax.broadcasted_iota(jnp.int32, (tile_n, 1), 0)
            z = jnp.where(row < n_actual, z, 0.0)

        # Per-feature partial sums on the VPU/XLU; MXU stays free for the matmul.
        coef_ref[0:1, :] += jnp.sum(z, axis=0, keepdims=True)
        coef_ref[1:2, :] += jnp.sum(z * z, axis=0, keepdims=True)

        @pl.when(i == pl.num_programs(0) - 1)
        def _finalize():
            mean = coef_ref[0:1, :] * inv_n
            var = jnp.maximum(coef_ref[1:2, :] * inv_n - mean * mean, 0.0)
            scale = g_ref[...] * jax.lax.rsqrt(var + BN_EPS)
            coef_ref[0:1, :] = scale
            coef_ref[1:2, :] = be_ref[...] - mean * scale

    return kernel


# ----------------------------------------------------------- tiled pass B: normalize
def _norm_kernel(x_ref, wt_ref, coef_ref, o_ref):
    z = jnp.dot(x_ref[...], wt_ref[...], preferred_element_type=jnp.float32)
    o_ref[...] = jnp.maximum(z * coef_ref[0:1, :] + coef_ref[1:2, :],
                             0.0).astype(o_ref.dtype)


def point_feature_net(x, weight, bias, gamma, beta, *,
                      tile_n=8192, use_bf16_matmul=False):
    """
    x:      (N, F_in)        float32
    weight: (F_out, F_in)    float32   (PyTorch Linear layout)
    bias:   (F_out,)         float32   (kept for interface parity; cancels under BN)
    gamma:  (F_out,)         float32   (BatchNorm1d weight)
    beta:   (F_out,)         float32   (BatchNorm1d bias)
    returns (N, F_out) float32
    """
    del bias  # (z + b) - mean(z + b) == z - mean(z): Linear bias cancels exactly.

    n, f_in = x.shape
    f_out = weight.shape[0]

    in_dtype = jnp.bfloat16 if use_bf16_matmul else x.dtype
    x_in = x.astype(in_dtype)                              # no padded copy of x
    wt = weight.T.astype(in_dtype)                         # (F_in, F_out), unpadded
    g2 = gamma.reshape(1, f_out).astype(jnp.float32)
    be2 = beta.reshape(1, f_out).astype(jnp.float32)

    itemsize = jnp.dtype(in_dtype).itemsize
    lane = 128

    # ---- VMEM budget & tile size ------------------------------------------------
    try:
        phys_vmem = int(pltpu.get_tpu_info().vmem_capacity_bytes)
    except Exception:                       # conservative fallback (v7x per-TC size)
        phys_vmem = 64 * 1024 * 1024
    budget = min(phys_vmem * 3 // 4, 96 * 1024 * 1024)

    tile = max(8, (min(int(tile_n), _round_up(n, 8)) // 8) * 8)

    def _working_set(t):
        x_buf = 2 * t * _round_up(f_in, lane) * itemsize   # double-buffered x tiles
        o_buf = 2 * t * _round_up(f_out, lane) * 4          # double-buffered out tiles
        return x_buf + o_buf + 2 * 1024 * 1024               # resident params + slack

    while _working_set(tile) > budget and tile > 512:
        tile //= 2
    vmem_limit = int(min(budget, max(32 * 1024 * 1024, 2 * _working_set(tile))))

    # ---- Fast path: whole point cloud fits one VMEM-resident block ----------------
    if n <= tile:
        return pl.pallas_call(
            _make_fused_kernel(n),
            out_shape=jax.ShapeDtypeStruct((n, f_out), jnp.float32),
            grid_spec=pltpu.PrefetchScalarGridSpec(
                num_scalar_prefetch=0,
                grid=(1,),
                in_specs=[
                    pl.BlockSpec((n, f_in), lambda i: (0, 0)),
                    pl.BlockSpec((f_in, f_out), lambda i: (0, 0)),
                    pl.BlockSpec((1, f_out), lambda i: (0, 0)),
                    pl.BlockSpec((1, f_out), lambda i: (0, 0)),
                ],
                out_specs=pl.BlockSpec((n, f_out), lambda i: (0, 0)),
            ),
            compiler_params=pltpu.CompilerParams(
                dimension_semantics=("arbitrary",),
                vmem_limit_bytes=vmem_limit,
            ),
            cost_estimate=pl.CostEstimate(
                flops=2 * n * f_in * f_out + 6 * n * f_out,
                transcendentals=0,
                bytes_accessed=n * f_in * itemsize + n * f_out * 4
                + f_in * f_out * itemsize),
        )(x_in, wt, g2, be2)

    # ---- Tiled two-pass path -------------------------------------------------------
    n_tiles = pl.cdiv(n, tile)
    ragged = (n % tile) != 0

    # Pass A: accumulate per-feature sum / sumsq over all N tiles, emit [scale; shift].
    coef = pl.pallas_call(
        _make_stats_kernel(n_actual=n, tile_n=tile, ragged=ragged),
        out_shape=jax.ShapeDtypeStruct((2, f_out), jnp.float32),
        grid_spec=pltpu.PrefetchScalarGridSpec(
            num_scalar_prefetch=0,
            grid=(n_tiles,),
            in_specs=[
                pl.BlockSpec((tile, f_in), lambda i: (i, 0)),    # x tiles (pipelined)
                pl.BlockSpec((f_in, f_out), lambda i: (0, 0)),   # Wt (VMEM resident)
                pl.BlockSpec((1, f_out), lambda i: (0, 0)),      # gamma (resident)
                pl.BlockSpec((1, f_out), lambda i: (0, 0)),      # beta (resident)
            ],
            # Accumulator output: same block every step, written back once at the end.
            out_specs=pl.BlockSpec((2, f_out), lambda i: (0, 0)),
        ),
        compiler_params=pltpu.CompilerParams(
            dimension_semantics=("arbitrary",),     # global reduction over N tiles
            vmem_limit_bytes=vmem_limit,
        ),
        cost_estimate=pl.CostEstimate(
            flops=2 * n * f_in * f_out + 3 * n * f_out,
            transcendentals=0,
            bytes_accessed=n * f_in * itemsize + f_in * f_out * itemsize
            + 2 * f_out * 4),
    )(x_in, wt, g2, be2)

    # Pass B: recompute z per tile (cheaper than storing/reloading it), normalize+ReLU.
    out = pl.pallas_call(
        _norm_kernel,
        out_shape=jax.ShapeDtypeStruct((n, f_out), jnp.float32),
        grid_spec=pltpu.PrefetchScalarGridSpec(
            num_scalar_prefetch=0,
            grid=(n_tiles,),
            in_specs=[
                pl.BlockSpec((tile, f_in), lambda i: (i, 0)),    # x tiles (pipelined)
                pl.BlockSpec((f_in, f_out), lambda i: (0, 0)),   # Wt (resident)
                pl.BlockSpec((2, f_out), lambda i: (0, 0)),      # [scale; shift]
            ],
            out_specs=pl.BlockSpec((tile, f_out), lambda i: (i, 0)),
        ),
        compiler_params=pltpu.CompilerParams(
            # Tiles are independent here -> shardable across TensorCores.
            dimension_semantics=("parallel",),
            vmem_limit_bytes=vmem_limit,
        ),
        cost_estimate=pl.CostEstimate(
            flops=2 * n * f_in * f_out + 3 * n * f_out,
            transcendentals=0,
            bytes_accessed=n * f_in * itemsize + n * f_out * 4
            + f_in * f_out * itemsize),
    )(x_in, wt, coef)

    return out


def _reference(x, weight, bias, gamma, beta):
    y = jnp.dot(x, weight.T, precision=jax.lax.Precision.HIGHEST) + bias
    mean = jnp.mean(y, axis=0, keepdims=True)
    var = jnp.mean((y - mean) ** 2, axis=0, keepdims=True)
    y = (y - mean) * jax.lax.rsqrt(var + BN_EPS) * gamma + beta
    return jnp.maximum(y, 0.0)


if __name__ == "__main__":
    N_POINTS, IN_FEATURES, OUT_FEATURES = 200, 32, 64

    key = jax.random.PRNGKey(0)
    k_x, k_w, k_b, k_g, k_be = jax.random.split(key, 5)

    x = jax.random.normal(k_x, (N_POINTS, IN_FEATURES), dtype=jnp.float32)
    bound = 1.0 / (IN_FEATURES ** 0.5)
    weight = jax.random.uniform(k_w, (OUT_FEATURES, IN_FEATURES),
                                minval=-bound, maxval=bound, dtype=jnp.float32)
    bias = jax.random.uniform(k_b, (OUT_FEATURES,),
                              minval=-bound, maxval=bound, dtype=jnp.float32)
    gamma = jax.random.uniform(k_g, (OUT_FEATURES,),
                               minval=0.5, maxval=1.5, dtype=jnp.float32)
    beta = 0.1 * jax.random.normal(k_be, (OUT_FEATURES,), dtype=jnp.float32)

    ref = _reference(x, weight, bias, gamma, beta)

    # 1) Small-N fused fast path (single VMEM-resident block, no grid overhead).
    out_fast = jax.block_until_ready(point_feature_net(x, weight, bias, gamma, beta))
    assert out_fast.shape == (N_POINTS, OUT_FEATURES)
    assert float(jnp.max(jnp.abs(out_fast - ref))) < 2e-4

    # 2) Tiled two-pass path; small tile forces multiple tiles and a ragged last tile.
    out_tiled = jax.block_until_ready(
        point_feature_net(x, weight, bias, gamma, beta, tile_n=64))
    assert out_tiled.shape == (N_POINTS, OUT_FEATURES)
    assert float(jnp.max(jnp.abs(out_tiled - ref))) < 2e-4

    # 3) bf16 input-stream variant (BN stats computed from bf16 products -> loose tol).
    out_bf16 = jax.block_until_ready(
        point_feature_net(x, weight, bias, gamma, beta, tile_n=64,
                          use_bf16_matmul=True))
    assert float(jnp.max(jnp.abs(out_bf16 - ref))) < 1e-1

    print("KERNEL_OK")
</pallas_src>

<mosaic_0001>
module attributes {stable_mosaic.version = 11 : i64} {
  func.func @kernel(%arg0: i32, %arg1: memref<200x32xf32, #tpu.memory_space<vmem>>, %arg2: memref<32x64xf32, #tpu.memory_space<vmem>>, %arg3: memref<1x64xf32, #tpu.memory_space<vmem>>, %arg4: memref<1x64xf32, #tpu.memory_space<vmem>>, %arg5: memref<200x64xf32, #tpu.memory_space<vmem>>) attributes {dimension_semantics = [#tpu.dimension_semantics<arbitrary>], iteration_bounds = array<i64: 1>, scalar_prefetch = 0 : i64, scratch_operands = 0 : i64, tpu.core_type = #tpu.core_type<tc>, window_params = [{pipeline_mode = #tpu.pipeline_mode<synchronous>, transform_indices = @transform_0, window_bounds = array<i64: 200, 32>}, {pipeline_mode = #tpu.pipeline_mode<synchronous>, transform_indices = @transform_1, window_bounds = array<i64: 32, 64>}, {pipeline_mode = #tpu.pipeline_mode<synchronous>, transform_indices = @transform_2, window_bounds = array<i64: 1, 64>}, {pipeline_mode = #tpu.pipeline_mode<synchronous>, transform_indices = @transform_3, window_bounds = array<i64: 1, 64>}, {pipeline_mode = #tpu.pipeline_mode<synchronous>, transform_indices = @transform_4, window_bounds = array<i64: 200, 64>}]} {
    %c0 = arith.constant 0 : index
    %c0_0 = arith.constant 0 : index
    %0 = vector.load %arg1[%c0, %c0_0] : memref<200x32xf32, #tpu.memory_space<vmem>>, vector<200x32xf32>
    %c0_1 = arith.constant 0 : index
    %c0_2 = arith.constant 0 : index
    %1 = vector.load %arg2[%c0_1, %c0_2] : memref<32x64xf32, #tpu.memory_space<vmem>>, vector<32x64xf32>
    %cst = arith.constant dense<0.000000e+00> : vector<200x64xf32>
    %2 = tpu.matmul %0, %1, %cst {dimension_numbers = #tpu.dot_dimension_numbers<[1], [0], [0], [1], [0, 0, 1, 1], [], []>} : vector<200x32xf32>, vector<32x64xf32>, vector<200x64xf32> -> vector<200x64xf32>
    %cst_3 = arith.constant dense<0.000000e+00> : vector<64xf32>
    %3 = vector.multi_reduction <add>, %2, %cst_3 [0] : vector<200x64xf32> to vector<64xf32>
    %4 = vector.shape_cast %3 : vector<64xf32> to vector<1x64xf32>
    %cst_4 = arith.constant 5.000000e-03 : f32
    %5 = vector.broadcast %cst_4 : f32 to vector<1x64xf32>
    %6 = arith.mulf %4, %5 : vector<1x64xf32>
    %7 = vector.broadcast %6 : vector<1x64xf32> to vector<200x64xf32>
    %8 = arith.subf %2, %7 : vector<200x64xf32>
    %9 = arith.mulf %8, %8 : vector<200x64xf32>
    %cst_5 = arith.constant dense<0.000000e+00> : vector<64xf32>
    %10 = vector.multi_reduction <add>, %9, %cst_5 [0] : vector<200x64xf32> to vector<64xf32>
    %11 = vector.shape_cast %10 : vector<64xf32> to vector<1x64xf32>
    %cst_6 = arith.constant 5.000000e-03 : f32
    %12 = vector.broadcast %cst_6 : f32 to vector<1x64xf32>
    %13 = arith.mulf %11, %12 : vector<1x64xf32>
    %c0_7 = arith.constant 0 : index
    %c0_8 = arith.constant 0 : index
    %14 = vector.load %arg3[%c0_7, %c0_8] : memref<1x64xf32, #tpu.memory_space<vmem>>, vector<1x64xf32>
    %cst_9 = arith.constant 9.99999974E-6 : f32
    %15 = vector.broadcast %cst_9 : f32 to vector<1x64xf32>
    %16 = arith.addf %13, %15 : vector<1x64xf32>
    %17 = math.rsqrt %16 : vector<1x64xf32>
    %18 = arith.mulf %14, %17 : vector<1x64xf32>
    %19 = vector.broadcast %18 : vector<1x64xf32> to vector<200x64xf32>
    %20 = arith.mulf %8, %19 : vector<200x64xf32>
    %c0_10 = arith.constant 0 : index
    %c0_11 = arith.constant 0 : index
    %21 = vector.load %arg4[%c0_10, %c0_11] : memref<1x64xf32, #tpu.memory_space<vmem>>, vector<1x64xf32>
    %22 = vector.broadcast %21 : vector<1x64xf32> to vector<200x64xf32>
    %23 = arith.addf %20, %22 : vector<200x64xf32>
    %cst_12 = arith.constant 0.000000e+00 : f32
    %24 = vector.broadcast %cst_12 : f32 to vector<200x64xf32>
    %25 = arith.maximumf %23, %24 : vector<200x64xf32>
    %c0_13 = arith.constant 0 : index
    %c0_14 = arith.constant 0 : index
    %26 = vector.load %arg5[%c0_13, %c0_14] : memref<200x64xf32, #tpu.memory_space<vmem>>, vector<200x64xf32>
    tpu.vector_store %arg5[%c0_13, %c0_14], %25 {strides = array<i32>} : memref<200x64xf32, #tpu.memory_space<vmem>>, vector<200x64xf32>,
    return
  }
  func.func @transform_0(%arg0: i32) -> (i32, i32) {
    %c0_i32 = arith.constant 0 : i32
    %c0_i32_0 = arith.constant 0 : i32
    %c0_i32_1 = arith.constant 0 : i32
    return %c0_i32, %c0_i32_0 : i32, i32
  }
  func.func @transform_1(%arg0: i32) -> (i32, i32) {
    %c0_i32 = arith.constant 0 : i32
    %c0_i32_0 = arith.constant 0 : i32
    %c0_i32_1 = arith.constant 0 : i32
    return %c0_i32, %c0_i32_0 : i32, i32
  }
  func.func @transform_2(%arg0: i32) -> (i32, i32) {
    %c0_i32 = arith.constant 0 : i32
    %c0_i32_0 = arith.constant 0 : i32
    %c0_i32_1 = arith.constant 0 : i32
    return %c0_i32, %c0_i32_0 : i32, i32
  }
  func.func @transform_3(%arg0: i32) -> (i32, i32) {
    %c0_i32 = arith.constant 0 : i32
    %c0_i32_0 = arith.constant 0 : i32
    %c0_i32_1 = arith.constant 0 : i32
    return %c0_i32, %c0_i32_0 : i32, i32
  }
  func.func @transform_4(%arg0: i32) -> (i32, i32) {
    %c0_i32 = arith.constant 0 : i32
    %c0_i32_0 = arith.constant 0 : i32
    %c0_i32_1 = arith.constant 0 : i32
    return %c0_i32, %c0_i32_0 : i32, i32
  }
}

</mosaic_0001>

<llo_original>
// kernel: tpu_custom_call.1
$region0: #{tpu_custom_call.1}
  #allocation0 [shape = 'u32[]', space=smem, size = 0x4, offset = 0x4, fixed_abs, tag = 'smem constant byte address 0x4 - core index']
  #allocation1 [shape = 'u32[72,128]{1,0:T(1,128)}', space=vmem, size = 0x9000, scoped, tag = 'internal scratch']
  %s0 = inlined_call_operand.vmem [shape: f32[200,32], index: 0, kind: input, shape index: {}]
  %s1 = inlined_call_operand.vmem [shape: f32[32,64], index: 1, kind: input, shape index: {}]
  %s2 = inlined_call_operand.vmem [shape: f32[1,64], index: 2, kind: input, shape index: {}]
  %s3 = inlined_call_operand.vmem [shape: f32[1,64], index: 3, kind: input, shape index: {}]
  %s4 = inlined_call_operand.vmem [shape: f32[200,64], index: 4, kind: output, shape index: {}]
  %s5 = sld [smem:[#allocation0]]
  $region26: #{tpu_custom_call.1} parent=0
    _
  %s7 = ssub.s32 1, %s5
  %s8 = scalar_select 0, %s7, %s5
  // Predicated region
  $region2: #{tpu_custom_call.1} parent=0 // pred_check
    _
  $region3: #{tpu_custom_call.1} parent=0 // pred_check_branch
    %10 = sbr.rel (0) target = $region5
  $region4: #{tpu_custom_call.1} parent=0 // pred_region
    _
  $region5: #{tpu_custom_call.1} parent=0 // pred_fallthru
    _
  // Predicated region
  $region6: #{tpu_custom_call.1} parent=0 // pred_check
    _
  $region7: #{tpu_custom_call.1} parent=0 // pred_check_branch
    %12 = sbr.rel (0) target = $region9
  $region8: #{tpu_custom_call.1} parent=0 // pred_region
    _
  $region9: #{tpu_custom_call.1} parent=0 // pred_fallthru
    _
  // Predicated region
  $region10: #{tpu_custom_call.1} parent=0 // pred_check
    _
  $region11: #{tpu_custom_call.1} parent=0 // pred_check_branch
    %14 = sbr.rel (0) target = $region13
  $region12: #{tpu_custom_call.1} parent=0 // pred_region
    _
  $region13: #{tpu_custom_call.1} parent=0 // pred_fallthru
    _
  // Predicated region
  $region14: #{tpu_custom_call.1} parent=0 // pred_check
    _
  $region15: #{tpu_custom_call.1} parent=0 // pred_check_branch
    %16 = sbr.rel (0) target = $region17
  $region16: #{tpu_custom_call.1} parent=0 // pred_region
    _
  $region17: #{tpu_custom_call.1} parent=0 // pred_fallthru
    _
  %v17 = vld [vmem:[%s0] sm:$0xff]
  %v18 = vld [vmem:[%s0 + $0x8] sm:$0xff]
  %v19 = vld [vmem:[%s0 + $0x10] sm:$0xff]
  %v20 = vld [vmem:[%s0 + $0x18] sm:$0xff]
  %v21 = vld [vmem:[%s0 + $0x20] sm:$0xff]
  %v22 = vld [vmem:[%s0 + $0x28] sm:$0xff]
  %v23 = vld [vmem:[%s0 + $0x30] sm:$0xff]
  %v24 = vld [vmem:[%s0 + $0x38] sm:$0xff]
  %v25 = vld [vmem:[%s0 + $0x40] sm:$0xff]
  %v26 = vld [vmem:[%s0 + $0x48] sm:$0xff]
  %v27 = vld [vmem:[%s0 + $0x50] sm:$0xff]
  %v28 = vld [vmem:[%s0 + $0x58] sm:$0xff]
  %v29 = vld [vmem:[%s0 + $0x60] sm:$0xff]
  %v30 = vld [vmem:[%s0 + $0x68] sm:$0xff]
  %v31 = vld [vmem:[%s0 + $0x70] sm:$0xff]
  %v32 = vld [vmem:[%s0 + $0x78] sm:$0xff]
  %v33 = vld [vmem:[%s0 + $0x80] sm:$0xff]
  %v34 = vld [vmem:[%s0 + $0x88] sm:$0xff]
  %v35 = vld [vmem:[%s0 + $0x90] sm:$0xff]
  %v36 = vld [vmem:[%s0 + $0x98] sm:$0xff]
  %v37 = vld [vmem:[%s0 + $0xa0] sm:$0xff]
  %v38 = vld [vmem:[%s0 + $0xa8] sm:$0xff]
  %v39 = vld [vmem:[%s0 + $0xb0] sm:$0xff]
  %v40 = vld [vmem:[%s0 + $0xb8] sm:$0xff]
  %v41 = vld [vmem:[%s0 + $0xc0] sm:$0xff]
  %v42 = vld [vmem:[%s1] sm:$0xff]
  %v43 = vld [vmem:[%s1 + $0x8] sm:$0xff]
  %v44 = vld [vmem:[%s1 + $0x10] sm:$0xff]
  %v45 = vld [vmem:[%s1 + $0x18] sm:$0xff]
  %vm46 = vcmask 261120
  %v48 = vsel %vm46, %v17, 0
  %v51 = vsel %vm46, %v18, 0
  %v54 = vsel %vm46, %v19, 0
  %v57 = vsel %vm46, %v20, 0
  %v60 = vsel %vm46, %v21, 0
  %v63 = vsel %vm46, %v22, 0
  %v66 = vsel %vm46, %v23, 0
  %v69 = vsel %vm46, %v24, 0
  %v72 = vsel %vm46, %v25, 0
  %v75 = vsel %vm46, %v26, 0
  %v78 = vsel %vm46, %v27, 0
  %v81 = vsel %vm46, %v28, 0
  %v84 = vsel %vm46, %v29, 0
  %v87 = vsel %vm46, %v30, 0
  %v90 = vsel %vm46, %v31, 0
  %v93 = vsel %vm46, %v32, 0
  %v96 = vsel %vm46, %v33, 0
  %v99 = vsel %vm46, %v34, 0
  %v102 = vsel %vm46, %v35, 0
  %v105 = vsel %vm46, %v36, 0
  %v108 = vsel %vm46, %v37, 0
  %v111 = vsel %vm46, %v38, 0
  %v114 = vsel %vm46, %v39, 0
  %v117 = vsel %vm46, %v40, 0
  %v120 = vsel %vm46, %v41, 0
  %122 = vmatpush.msra.mxu0 0.0
  %123 = vmatpush.msra.mxu0 0.0
  %124 = vmatpush.msra.mxu0 0.0
  %125 = vmatpush.msra.mxu0 0.0
  %126 = vmatpush.msra.mxu0 0.0
  %127 = vmatpush.msra.mxu0 0.0
  %128 = vmatpush.msra.mxu0 0.0
  %129 = vmatpush.msra.mxu0 0.0
  %130 = vmatpush.msra.mxu0 0.0
  %131 = vmatpush.msra.mxu0 0.0
  %132 = vmatpush.msra.mxu0 0.0
  %133 = vmatpush.msra.mxu0 0.0
  %134 = vmatpush.msra.mxu0 %v45
  %135 = vmatpush.msra.mxu0 %v44
  %136 = vmatpush.msra.mxu0 %v43
  %137 = vmatpush.msra.mxu0 %v42
  %138 = vmatmul.f32.gmra.mxu0 %v48
  %v139 = vpop.f32.mrf.mxu0
  %v140 = vadd.f32 0.0, %v139
  %141 = vmatmul.f32.gmra.mxu0 %v51
  %v142 = vpop.f32.mrf.mxu0
  %v143 = vadd.f32 0.0, %v142
  %144 = vmatmul.f32.gmra.mxu0 %v54
  %v145 = vpop.f32.mrf.mxu0
  %v146 = vadd.f32 0.0, %v145
  %147 = vmatmul.f32.gmra.mxu0 %v57
  %v148 = vpop.f32.mrf.mxu0
  %v149 = vadd.f32 0.0, %v148
  %150 = vmatmul.f32.gmra.mxu0 %v60
  %v151 = vpop.f32.mrf.mxu0
  %v152 = vadd.f32 0.0, %v151
  %153 = vmatmul.f32.gmra.mxu0 %v63
  %v154 = vpop.f32.mrf.mxu0
  %v155 = vadd.f32 0.0, %v154
  %156 = vmatmul.f32.gmra.mxu0 %v66
  %v157 = vpop.f32.mrf.mxu0
  %v158 = vadd.f32 0.0, %v157
  %159 = vmatmul.f32.gmra.mxu0 %v69
  %v160 = vpop.f32.mrf.mxu0
  %v161 = vadd.f32 0.0, %v160
  %162 = vmatmul.f32.gmra.mxu0 %v72
  %v163 = vpop.f32.mrf.mxu0
  %v164 = vadd.f32 0.0, %v163
  %165 = vmatmul.f32.gmra.mxu0 %v75
  %v166 = vpop.f32.mrf.mxu0
  %v167 = vadd.f32 0.0, %v166
  %168 = vmatmul.f32.gmra.mxu0 %v78
  %v169 = vpop.f32.mrf.mxu0
  %v170 = vadd.f32 0.0, %v169
  %171 = vmatmul.f32.gmra.mxu0 %v81
  %v172 = vpop.f32.mrf.mxu0
  %v173 = vadd.f32 0.0, %v172
  %174 = vmatmul.f32.gmra.mxu0 %v84
  %v175 = vpop.f32.mrf.mxu0
  %v176 = vadd.f32 0.0, %v175
  %177 = vmatmul.f32.gmra.mxu0 %v87
  %v178 = vpop.f32.mrf.mxu0
  %v179 = vadd.f32 0.0, %v178
  %180 = vmatmul.f32.gmra.mxu0 %v90
  %v181 = vpop.f32.mrf.mxu0
  %v182 = vadd.f32 0.0, %v181
  %183 = vmatmul.f32.gmra.mxu0 %v93
  %v184 = vpop.f32.mrf.mxu0
  %v185 = vadd.f32 0.0, %v184
  %186 = vmatmul.f32.gmra.mxu0 %v96
  %v187 = vpop.f32.mrf.mxu0
  %v188 = vadd.f32 0.0, %v187
  %189 = vmatmul.f32.gmra.mxu0 %v99
  %v190 = vpop.f32.mrf.mxu0
  %v191 = vadd.f32 0.0, %v190
  %192 = vmatmul.f32.gmra.mxu0 %v102
  %v193 = vpop.f32.mrf.mxu0
  %v194 = vadd.f32 0.0, %v193
  %195 = vmatmul.f32.gmra.mxu0 %v105
  %v196 = vpop.f32.mrf.mxu0
  %v197 = vadd.f32 0.0, %v196
  %198 = vmatmul.f32.gmra.mxu0 %v108
  %v199 = vpop.f32.mrf.mxu0
  %v200 = vadd.f32 0.0, %v199
  %201 = vmatmul.f32.gmra.mxu0 %v111
  %v202 = vpop.f32.mrf.mxu0
  %v203 = vadd.f32 0.0, %v202
  %204 = vmatmul.f32.gmra.mxu0 %v114
  %v205 = vpop.f32.mrf.mxu0
  %v206 = vadd.f32 0.0, %v205
  %207 = vmatmul.f32.gmra.mxu0 %v117
  %v208 = vpop.f32.mrf.mxu0
  %v209 = vadd.f32 0.0, %v208
  %210 = vmatmul.f32.gmra.mxu0 %v120
  %v211 = vpop.f32.mrf.mxu0
  %v212 = vadd.f32 0.0, %v211
  %213 = vdwg.mxu0
  %vm214 = vcmask 523264
  %v215 = vsel %vm214, %v140, 0.0
  %v216 = vsel %vm214, %v143, 0.0
  %v217 = vadd.f32 %v215, %v216
  %v218 = vsel %vm214, %v146, 0.0
  %v219 = vadd.f32 %v217, %v218
  %v220 = vsel %vm214, %v149, 0.0
  %v221 = vadd.f32 %v219, %v220
  %v222 = vsel %vm214, %v152, 0.0
  %v223 = vadd.f32 %v221, %v222
  %v224 = vsel %vm214, %v155, 0.0
  %v225 = vadd.f32 %v223, %v224
  %v226 = vsel %vm214, %v158, 0.0
  %v227 = vadd.f32 %v225, %v226
  %v228 = vsel %vm214, %v161, 0.0
  %v229 = vadd.f32 %v227, %v228
  %v230 = vsel %vm214, %v164, 0.0
  %v231 = vadd.f32 %v229, %v230
  %v232 = vsel %vm214, %v167, 0.0
  %v233 = vadd.f32 %v231, %v232
  %v234 = vsel %vm214, %v170, 0.0
  %v235 = vadd.f32 %v233, %v234
  %v236 = vsel %vm214, %v173, 0.0
  %v237 = vadd.f32 %v235, %v236
  %v238 = vsel %vm214, %v176, 0.0
  %v239 = vadd.f32 %v237, %v238
  %v240 = vsel %vm214, %v179, 0.0
  %v241 = vadd.f32 %v239, %v240
  %v242 = vsel %vm214, %v182, 0.0
  %v243 = vadd.f32 %v241, %v242
  %v244 = vsel %vm214, %v185, 0.0
  %v245 = vadd.f32 %v243, %v244
  %v246 = vsel %vm214, %v188, 0.0
  %v247 = vadd.f32 %v245, %v246
  %v248 = vsel %vm214, %v191, 0.0
  %v249 = vadd.f32 %v247, %v248
  %v250 = vsel %vm214, %v194, 0.0
  %v251 = vadd.f32 %v249, %v250
  %v252 = vsel %vm214, %v197, 0.0
  %v253 = vadd.f32 %v251, %v252
  %v254 = vsel %vm214, %v200, 0.0
  %v255 = vadd.f32 %v253, %v254
  %v256 = vsel %vm214, %v203, 0.0
  %v257 = vadd.f32 %v255, %v256
  %v258 = vsel %vm214, %v206, 0.0
  %v259 = vadd.f32 %v257, %v258
  %v260 = vsel %vm214, %v209, 0.0
  %v261 = vadd.f32 %v259, %v260
  %v262 = vsel %vm214, %v212, 0.0
  %v263 = vadd.f32 %v261, %v262
  %v264 = vrot.slane %v263, 4
  %v265 = vadd.f32 %v263, %v264
  %v266 = vrot.slane %v265, 2
  %v267 = vadd.f32 %v265, %v266
  %v268 = vrot.slane %v267, 1
  %v269 = vadd.f32 %v267, %v268
  %v270 = vmul.f32 %v269, 0.005
  %v271 = vsub.f32 %v140, %v270
  %v272 = vsub.f32 %v143, %v270
  %v273 = vsub.f32 %v146, %v270
  %v274 = vsub.f32 %v149, %v270
  %v275 = vsub.f32 %v152, %v270
  %v276 = vsub.f32 %v155, %v270
  %v277 = vsub.f32 %v158, %v270
  %v278 = vsub.f32 %v161, %v270
  %v279 = vsub.f32 %v164, %v270
  %v280 = vsub.f32 %v167, %v270
  %v281 = vsub.f32 %v170, %v270
  %v282 = vsub.f32 %v173, %v270
  %v283 = vsub.f32 %v176, %v270
  %v284 = vsub.f32 %v179, %v270
  %v285 = vsub.f32 %v182, %v270
  %v286 = vsub.f32 %v185, %v270
  %v287 = vsub.f32 %v188, %v270
  %v288 = vsub.f32 %v191, %v270
  %v289 = vsub.f32 %v194, %v270
  %v290 = vsub.f32 %v197, %v270
  %v291 = vsub.f32 %v200, %v270
  %v292 = vsub.f32 %v203, %v270
  %v293 = vsub.f32 %v206, %v270
  %v294 = vsub.f32 %v209, %v270
  %v295 = vsub.f32 %v212, %v270
  %v296 = vmul.f32 %v271, %v271
  %v297 = vmul.f32 %v272, %v272
  %v298 = vmul.f32 %v273, %v273
  %v299 = vmul.f32 %v274, %v274
  %v300 = vmul.f32 %v275, %v275
  %v301 = vmul.f32 %v276, %v276
  %v302 = vmul.f32 %v277, %v277
  %v303 = vmul.f32 %v278, %v278
  %v304 = vmul.f32 %v279, %v279
  %v305 = vmul.f32 %v280, %v280
  %v306 = vmul.f32 %v281, %v281
  %v307 = vmul.f32 %v282, %v282
  %v308 = vmul.f32 %v283, %v283
  %v309 = vmul.f32 %v284, %v284
  %v310 = vmul.f32 %v285, %v285
  %v311 = vmul.f32 %v286, %v286
  %v312 = vmul.f32 %v287, %v287
  %v313 = vmul.f32 %v288, %v288
  %v314 = vmul.f32 %v289, %v289
  %v315 = vmul.f32 %v290, %v290
  %v316 = vmul.f32 %v291, %v291
  %v317 = vmul.f32 %v292, %v292
  %v318 = vmul.f32 %v293, %v293
  %v319 = vmul.f32 %v294, %v294
  %v320 = vmul.f32 %v295, %v295
  %v321 = vsel %vm214, %v296, 0.0
  %v322 = vsel %vm214, %v297, 0.0
  %v323 = vadd.f32 %v321, %v322
  %v324 = vsel %vm214, %v298, 0.0
  %v325 = vadd.f32 %v323, %v324
  %v326 = vsel %vm214, %v299, 0.0
  %v327 = vadd.f32 %v325, %v326
  %v328 = vsel %vm214, %v300, 0.0
  %v329 = vadd.f32 %v327, %v328
  %v330 = vsel %vm214, %v301, 0.0
  %v331 = vadd.f32 %v329, %v330
  %v332 = vsel %vm214, %v302, 0.0
  %v333 = vadd.f32 %v331, %v332
  %v334 = vsel %vm214, %v303, 0.0
  %v335 = vadd.f32 %v333, %v334
  %v336 = vsel %vm214, %v304, 0.0
  %v337 = vadd.f32 %v335, %v336
  %v338 = vsel %vm214, %v305, 0.0
  %v339 = vadd.f32 %v337, %v338
  %v340 = vsel %vm214, %v306, 0.0
  %v341 = vadd.f32 %v339, %v340
  %v342 = vsel %vm214, %v307, 0.0
  %v343 = vadd.f32 %v341, %v342
  %v344 = vsel %vm214, %v308, 0.0
  %v345 = vadd.f32 %v343, %v344
  %v346 = vsel %vm214, %v309, 0.0
  %v347 = vadd.f32 %v345, %v346
  %v348 = vsel %vm214, %v310, 0.0
  %v349 = vadd.f32 %v347, %v348
  %v350 = vsel %vm214, %v311, 0.0
  %v351 = vadd.f32 %v349, %v350
  %v352 = vsel %vm214, %v312, 0.0
  %v353 = vadd.f32 %v351, %v352
  %v354 = vsel %vm214, %v313, 0.0
  %v355 = vadd.f32 %v353, %v354
  %v356 = vsel %vm214, %v314, 0.0
  %v357 = vadd.f32 %v355, %v356
  %v358 = vsel %vm214, %v315, 0.0
  %v359 = vadd.f32 %v357, %v358
  %v360 = vsel %vm214, %v316, 0.0
  %v361 = vadd.f32 %v359, %v360
  %v362 = vsel %vm214, %v317, 0.0
  %v363 = vadd.f32 %v361, %v362
  %v364 = vsel %vm214, %v318, 0.0
  %v365 = vadd.f32 %v363, %v364
  %v366 = vsel %vm214, %v319, 0.0
  %v367 = vadd.f32 %v365, %v366
  %v368 = vsel %vm214, %v320, 0.0
  %v369 = vadd.f32 %v367, %v368
  %v370 = vrot.slane %v369, 4
  %v371 = vadd.f32 %v369, %v370
  %v372 = vrot.slane %v371, 2
  %v373 = vadd.f32 %v371, %v372
  %v374 = vrot.slane %v373, 1
  %v375 = vadd.f32 %v373, %v374
  %v376 = vmul.f32 %v375, 0.005
  %v377 = vld [vmem:[%s2] sm:$0x1]
  %v378 = vadd.f32 %v376, 1e-05
  %v379 = vrsqrt.pop %v378
  %v380 = vmul.f32 %v379, %v378
  %v381 = vmul.f32 %v380, %v379
  %v382 = vmul.f32 0.5, %v381
  %v383 = vsub.f32 1.5, %v382
  %v384 = vmul.f32 %v379, %v383
  %vm385 = vweird.f32 %v378
  %vm386 = vweird.f32 %v379
  %vm387 = vmor %vm385, %vm386
  %v388 = vsel %vm387, %v379, %v384
  %v389 = vmul.f32 %v377, %v388
  %v391 = vperm.slane %v389, 0
  %v393 = vmul.f32 %v271, %v391
  %v394 = vmul.f32 %v272, %v391
  %v395 = vmul.f32 %v273, %v391
  %v396 = vmul.f32 %v274, %v391
  %v397 = vmul.f32 %v275, %v391
  %v398 = vmul.f32 %v276, %v391
  %v399 = vmul.f32 %v277, %v391
  %v400 = vmul.f32 %v278, %v391
  %v401 = vmul.f32 %v279, %v391
  %v402 = vmul.f32 %v280, %v391
  %v403 = vmul.f32 %v281, %v391
  %v404 = vmul.f32 %v282, %v391
  %v405 = vmul.f32 %v283, %v391
  %v406 = vmul.f32 %v284, %v391
  %v407 = vmul.f32 %v285, %v391
  %v408 = vmul.f32 %v286, %v391
  %v409 = vmul.f32 %v287, %v391
  %v410 = vmul.f32 %v288, %v391
  %v411 = vmul.f32 %v289, %v391
  %v412 = vmul.f32 %v290, %v391
  %v413 = vmul.f32 %v291, %v391
  %v414 = vmul.f32 %v292, %v391
  %v415 = vmul.f32 %v293, %v391
  %v416 = vmul.f32 %v294, %v391
  %v417 = vmul.f32 %v295, %v391
  %v418 = vld [vmem:[%s3] sm:$0x1]
  %v420 = vperm.slane %v418, 0
  %v422 = vadd.f32 %v393, %v420
  %v423 = vadd.f32 %v394, %v420
  %v424 = vadd.f32 %v395, %v420
  %v425 = vadd.f32 %v396, %v420
  %v426 = vadd.f32 %v397, %v420
  %v427 = vadd.f32 %v398, %v420
  %v428 = vadd.f32 %v399, %v420
  %v429 = vadd.f32 %v400, %v420
  %v430 = vadd.f32 %v401, %v420
  %v431 = vadd.f32 %v402, %v420
  %v432 = vadd.f32 %v403, %v420
  %v433 = vadd.f32 %v404, %v420
  %v434 = vadd.f32 %v405, %v420
  %v435 = vadd.f32 %v406, %v420
  %v436 = vadd.f32 %v407, %v420
  %v437 = vadd.f32 %v408, %v420
  %v438 = vadd.f32 %v409, %v420
  %v439 = vadd.f32 %v410, %v420
  %v440 = vadd.f32 %v411, %v420
  %v441 = vadd.f32 %v412, %v420
  %v442 = vadd.f32 %v413, %v420
  %v443 = vadd.f32 %v414, %v420
  %v444 = vadd.f32 %v415, %v420
  %v445 = vadd.f32 %v416, %v420
  %v446 = vadd.f32 %v417, %v420
  %v447 = vmax.f32 %v422, 0.0
  %v448 = vmax.f32 %v423, 0.0
  %v449 = vmax.f32 %v424, 0.0
  %v450 = vmax.f32 %v425, 0.0
  %v451 = vmax.f32 %v426, 0.0
  %v452 = vmax.f32 %v427, 0.0
  %v453 = vmax.f32 %v428, 0.0
  %v454 = vmax.f32 %v429, 0.0
  %v455 = vmax.f32 %v430, 0.0
  %v456 = vmax.f32 %v431, 0.0
  %v457 = vmax.f32 %v432, 0.0
  %v458 = vmax.f32 %v433, 0.0
  %v459 = vmax.f32 %v434, 0.0
  %v460 = vmax.f32 %v435, 0.0
  %v461 = vmax.f32 %v436, 0.0
  %v462 = vmax.f32 %v437, 0.0
  %v463 = vmax.f32 %v438, 0.0
  %v464 = vmax.f32 %v439, 0.0
  %v465 = vmax.f32 %v440, 0.0
  %v466 = vmax.f32 %v441, 0.0
  %v467 = vmax.f32 %v442, 0.0
  %v468 = vmax.f32 %v443, 0.0
  %v469 = vmax.f32 %v444, 0.0
  %v470 = vmax.f32 %v445, 0.0
  %v471 = vmax.f32 %v446, 0.0
  %472 = vst.msk [vmem:[%s4] sm:$0xff] %vm214, %v447
  %473 = vst.msk [vmem:[%s4 + $0x8] sm:$0xff] %vm214, %v448
  %474 = vst.msk [vmem:[%s4 + $0x10] sm:$0xff] %vm214, %v449
  %475 = vst.msk [vmem:[%s4 + $0x18] sm:$0xff] %vm214, %v450
  %476 = vst.msk [vmem:[%s4 + $0x20] sm:$0xff] %vm214, %v451
  %477 = vst.msk [vmem:[%s4 + $0x28] sm:$0xff] %vm214, %v452
  %478 = vst.msk [vmem:[%s4 + $0x30] sm:$0xff] %vm214, %v453
  %479 = vst.msk [vmem:[%s4 + $0x38] sm:$0xff] %vm214, %v454
  %480 = vst.msk [vmem:[%s4 + $0x40] sm:$0xff] %vm214, %v455
  %481 = vst.msk [vmem:[%s4 + $0x48] sm:$0xff] %vm214, %v456
  %482 = vst.msk [vmem:[%s4 + $0x50] sm:$0xff] %vm214, %v457
  %483 = vst.msk [vmem:[%s4 + $0x58] sm:$0xff] %vm214, %v458
  %484 = vst.msk [vmem:[%s4 + $0x60] sm:$0xff] %vm214, %v459
  %485 = vst.msk [vmem:[%s4 + $0x68] sm:$0xff] %vm214, %v460
  %486 = vst.msk [vmem:[%s4 + $0x70] sm:$0xff] %vm214, %v461
  %487 = vst.msk [vmem:[%s4 + $0x78] sm:$0xff] %vm214, %v462
  %488 = vst.msk [vmem:[%s4 + $0x80] sm:$0xff] %vm214, %v463
  %489 = vst.msk [vmem:[%s4 + $0x88] sm:$0xff] %vm214, %v464
  %490 = vst.msk [vmem:[%s4 + $0x90] sm:$0xff] %vm214, %v465
  %491 = vst.msk [vmem:[%s4 + $0x98] sm:$0xff] %vm214, %v466
  %492 = vst.msk [vmem:[%s4 + $0xa0] sm:$0xff] %vm214, %v467
  %493 = vst.msk [vmem:[%s4 + $0xa8] sm:$0xff] %vm214, %v468
  %494 = vst.msk [vmem:[%s4 + $0xb0] sm:$0xff] %vm214, %v469
  %495 = vst.msk [vmem:[%s4 + $0xb8] sm:$0xff] %vm214, %v470
  %496 = vst.msk [vmem:[%s4 + $0xc0] sm:$0xff] %vm214, %v471
  // Predicated region
  $region18: #{tpu_custom_call.1} parent=0 // pred_check
    _
  $region19: #{tpu_custom_call.1} parent=0 // pred_check_branch
    %498 = sbr.rel (0) target = $region21
  $region20: #{tpu_custom_call.1} parent=0 // pred_region
    _
  $region21: #{tpu_custom_call.1} parent=0 // pred_fallthru
    _
  // Predicated region
  $region22: #{tpu_custom_call.1} parent=0 // pred_check
    _
  $region23: #{tpu_custom_call.1} parent=0 // pred_check_branch
    %500 = sbr.rel (0) target = $region25
  $region24: #{tpu_custom_call.1} parent=0 // pred_region
    _
  $region25: #{tpu_custom_call.1} parent=0 // pred_fallthru
    _

</llo_original>
